<compile_context>
chip_gen: v6e
topology: v6e:2x2x1
jax: 0.10.0
libtpu: 0.0.40
codegen_flags: <defaults>
</compile_context>

<pallas_src>
import jax
import jax.numpy as jnp
from jax.experimental import pallas as pl
from jax.experimental.pallas import tpu as pltpu


def _mish_kernel(x_ref, o_ref):
    x = x_ref[...].astype(jnp.float32)
    # tanh(softplus(x)) = n*(n+2) / (n*(n+2) + 2), n = e^x (exact identity).
    # Clamp before exp to avoid f32 overflow; for x > 20, mish(x) == x in f32.
    xc = jnp.minimum(x, 20.0)
    n = jnp.exp(xc)
    t = n * (n + 2.0)
    if jnp.dtype(o_ref.dtype).itemsize <= 2:
        # 16-bit outputs: approx reciprocal (~2^-12 rel err, below bf16/fp16
        # output rounding) stays on the EUP slot.
        y = x * t * pl.reciprocal(t + 2.0, approx=True)
    else:
        # f32 path: exact divide so the result tracks the reference to ~ULPs.
        y = x * (t / (t + 2.0))
    o_ref[...] = jnp.where(x > 20.0, x, y).astype(o_ref.dtype)


def _mish_jax(x):
    # Plain-JAX Mish (used only for tiny ragged tails and as a reference).
    xf = x.astype(jnp.float32)
    return (xf * jnp.tanh(jax.nn.softplus(xf))).astype(x.dtype)


def _block_rows(rows, lanes, target_block_bytes, min_steps=8):
    """Block rows: ~target_block_bytes of f32 working set per block, but at
    least `min_steps` grid steps for anything over ~2 MiB so the pipeline
    overlaps and the v7x 2-TensorCore split can engage."""
    if rows <= 8:
        return rows
    # Size against 4 B/elem (the in-kernel f32 intermediates), independent of
    # the I/O dtype, so the VMEM working set is dtype-invariant.
    br = max(8, (target_block_bytes // (lanes * 4)) // 8 * 8)
    if rows * lanes * 4 >= 2 * 1024 * 1024:
        br = min(br, max(8, (pl.cdiv(rows, min_steps) // 8) * 8))
    return max(8, min(br, (rows // 8) * 8))


def _mish_slab(x2d, target_block_bytes, donate):
    rows, lanes = x2d.shape
    itemsize = jnp.dtype(x2d.dtype).itemsize
    br = _block_rows(rows, lanes, target_block_bytes)
    grid = (pl.cdiv(rows, br),)  # ragged last block is clipped on writeback
    n_elems = rows * lanes
    return pl.pallas_call(
        _mish_kernel,
        out_shape=jax.ShapeDtypeStruct((rows, lanes), x2d.dtype),
        grid_spec=pltpu.PrefetchScalarGridSpec(
            num_scalar_prefetch=0,
            grid=grid,
            in_specs=[pl.BlockSpec((br, lanes), lambda i: (i, 0))],
            out_specs=pl.BlockSpec((br, lanes), lambda i: (i, 0)),
        ),
        compiler_params=pltpu.CompilerParams(
            dimension_semantics=("parallel",),   # megacore-shardable on v7x
            vmem_limit_bytes=32 * 1024 * 1024,   # safe headroom on all gens
        ),
        cost_estimate=pl.CostEstimate(
            flops=8 * n_elems,
            transcendentals=n_elems,             # one exp per element
            bytes_accessed=2 * itemsize * n_elems,
        ),
        input_output_aliases={0: 0} if donate else {},
    )(x2d)


def mish(x, *, target_block_bytes=4 * 1024 * 1024, donate=False):
    """Mish(x) = x * tanh(softplus(x)), elementwise. Any shape / float dtype."""
    orig_shape = x.shape
    n = x.size
    if n == 0:
        return x

    # Widest lane-dense slab width that divides n exactly (no pad needed).
    lanes = None
    for w in (2048, 1024, 512, 256, 128):
        if n % w == 0:
            lanes = w
            break

    x_flat = jnp.reshape(x, (-1,))

    if lanes is None:
        # Ragged n: kernel on the 128-aligned prefix, <128-elem tail in plain
        # JAX, stitched back with one concatenate (no full pad/slice passes).
        n_main = (n // 128) * 128
        if n_main == 0:
            return jnp.reshape(_mish_jax(x_flat), orig_shape)
        main = _mish_slab(
            jnp.reshape(x_flat[:n_main], (n_main // 128, 128)),
            target_block_bytes, donate)
        tail = _mish_jax(x_flat[n_main:])
        # TODO(synk): the concatenate still costs one extra HBM pass over the
        # main body; acceptable for the rare non-128-aligned case.
        out_flat = jnp.concatenate([jnp.reshape(main, (-1,)), tail])
        return jnp.reshape(out_flat, orig_shape)

    out2d = _mish_slab(
        jnp.reshape(x_flat, (n // lanes, lanes)), target_block_bytes, donate)
    return jnp.reshape(out2d, orig_shape)


if __name__ == "__main__":
    key = jax.random.PRNGKey(0)
    # NCHW input, like a conv feature map: batch=2, channels=4, spatial=16x16.
    x = jax.random.normal(key, (2, 4, 16, 16), dtype=jnp.float32) * 3.0

    y = jax.block_until_ready(mish(x))

    y_ref = _mish_jax(x)
    assert y.shape == x.shape and y.dtype == x.dtype
    rel_err = jnp.max(jnp.abs(y - y_ref) / (1.0 + jnp.abs(y_ref)))
    assert rel_err < 1e-5, rel_err

    print("KERNEL_OK")
</pallas_src>

<mosaic_0001>
module attributes {stable_mosaic.version = 11 : i64} {
  func.func @_mish_kernel(%arg0: i32, %arg1: memref<1x2048xf32, #tpu.memory_space<vmem>>, %arg2: memref<1x2048xf32, #tpu.memory_space<vmem>>) attributes {dimension_semantics = [#tpu.dimension_semantics<parallel>], iteration_bounds = array<i64: 1>, scalar_prefetch = 0 : i64, scratch_operands = 0 : i64, tpu.core_type = #tpu.core_type<tc>, window_params = [{transform_indices = @transform_0, window_bounds = array<i64: 1, 2048>}, {transform_indices = @transform_1, window_bounds = array<i64: 1, 2048>}]} {
    %c0 = arith.constant 0 : index
    %c0_0 = arith.constant 0 : index
    %0 = vector.load %arg1[%c0, %c0_0] : memref<1x2048xf32, #tpu.memory_space<vmem>>, vector<1x2048xf32>
    %cst = arith.constant 2.000000e+01 : f32
    %1 = vector.broadcast %cst : f32 to vector<1x2048xf32>
    %2 = arith.minimumf %0, %1 : vector<1x2048xf32>
    %3 = math.exp %2 : vector<1x2048xf32>
    %cst_1 = arith.constant 2.000000e+00 : f32
    %4 = vector.broadcast %cst_1 : f32 to vector<1x2048xf32>
    %5 = arith.addf %3, %4 : vector<1x2048xf32>
    %6 = arith.mulf %3, %5 : vector<1x2048xf32>
    %cst_2 = arith.constant 2.000000e+00 : f32
    %7 = vector.broadcast %cst_2 : f32 to vector<1x2048xf32>
    %8 = arith.addf %6, %7 : vector<1x2048xf32>
    %9 = arith.divf %6, %8 : vector<1x2048xf32>
    %10 = arith.mulf %0, %9 : vector<1x2048xf32>
    %cst_3 = arith.constant 2.000000e+01 : f32
    %11 = vector.broadcast %cst_3 : f32 to vector<1x2048xf32>
    %12 = arith.cmpf ogt, %0, %11 : vector<1x2048xf32>
    %13 = arith.select %12, %0, %10 : vector<1x2048xi1>, vector<1x2048xf32>
    %c0_4 = arith.constant 0 : index
    %c0_5 = arith.constant 0 : index
    %14 = vector.load %arg2[%c0_4, %c0_5] : memref<1x2048xf32, #tpu.memory_space<vmem>>, vector<1x2048xf32>
    tpu.vector_store %arg2[%c0_4, %c0_5], %13 {strides = array<i32>} : memref<1x2048xf32, #tpu.memory_space<vmem>>, vector<1x2048xf32>,
    return
  }
  func.func @transform_0(%arg0: i32) -> (i32, i32) {
    %c0_i32 = arith.constant 0 : i32
    %c0_i32_0 = arith.constant 0 : i32
    return %arg0, %c0_i32 : i32, i32
  }
  func.func @transform_1(%arg0: i32) -> (i32, i32) {
    %c0_i32 = arith.constant 0 : i32
    %c0_i32_0 = arith.constant 0 : i32
    return %arg0, %c0_i32 : i32, i32
  }
}

</mosaic_0001>

<llo_original>
// kernel: tpu_custom_call.1
$region0: #{tpu_custom_call.1}
  #allocation0 [shape = 'u32[]', space=smem, size = 0x4, offset = 0x4, fixed_abs, tag = 'smem constant byte address 0x4 - core index']
  #allocation1 [shape = 'u32[144,128]{1,0:T(1,128)}', space=vmem, size = 0x12000, scoped, tag = 'internal scratch']
  %s0 = inlined_call_operand.hbm [shape: f32[1,2048], index: 0, kind: input, shape index: {}]
  %s1 = inlined_call_operand.hbm [shape: f32[1,2048], index: 1, kind: output, shape index: {}]
  %s2 = sld [smem:[#allocation0]]
  $region18: #{tpu_custom_call.1} parent=0
    _
  %s4 = ssub.s32 1, %s2
  %s5 = scalar_select 0, %s4, %s2
  $region1: #{tpu_custom_call.1} parent=0
    #allocation2 [shape = 'u8[8192]{0}', space=vmem, size = 0x2000, scoped, tag = 'input window, operand 0, single buffered']
    #allocation3 [shape = 's32[1]{0}', space=sflag, size = 0x4, scoped, tag = 'scoped memory for tpu_custom_call.1']
    #allocation4 [shape = 's32[1]{0}', space=sflag, size = 0x4, scoped, tag = 'scoped memory for tpu_custom_call.1']
    #allocation5 [shape = 'u8[8192]{0}', space=vmem, size = 0x2000, scoped, tag = 'output window, operand 0, single buffered']
    %6 = vsyncpa [#allocation3], 0
    %7 = vsyncpa [#allocation4], 0
    // Predicated region
    $region2: #{tpu_custom_call.1} parent=1 // pred_check
      _
    $region3: #{tpu_custom_call.1} parent=1 // pred_check_branch
      %9 = sbr.rel (0) target = $region5
    $region4: #{tpu_custom_call.1} parent=1 // pred_region
      %s11 = ssub.s32 256, 256
      %12 = vsyncadd [#allocation3], %s11
      %s14 = sshll.u32 [#allocation2], 4
      %s15 = int_to_ptr.vmem [resolvable:$true] %s14
      %17 = dma.hbm_to_vmem [thread:$0]  %s0, 256, %s15, [#allocation3]
    $region5: #{tpu_custom_call.1} parent=1 // pred_fallthru
      _
    // Predicated region
    $region6: #{tpu_custom_call.1} parent=1 // pred_check
      _
    $region7: #{tpu_custom_call.1} parent=1 // pred_check_branch
      %19 = sbr.rel (0) target = $region9
    $region8: #{tpu_custom_call.1} parent=1 // pred_region
      %20 = dma.done [#allocation3], 256
    $region9: #{tpu_custom_call.1} parent=1 // pred_fallthru
      _
    %v21 = vld [vmem:[#allocation2] sm:$0xff]
    %v22 = vld [vmem:[#allocation2 + $0x8] sm:$0xff]
    %v23 = vmin.f32 %v21, 20.0
    %v24 = vmin.f32 %v22, 20.0
    %v25 = vmul.f32 %v23, 1.442695
    %v26 = vpow.pop %v25
    %v27 = vmul.f32 %v24, 1.442695
    %v28 = vpow.pop %v27
    %v29 = vadd.f32 %v26, 2.0
    %v30 = vadd.f32 %v28, 2.0
    %v31 = vmul.f32 %v26, %v29
    %v32 = vmul.f32 %v28, %v30
    %v33 = vadd.f32 %v31, 2.0
    %v34 = vadd.f32 %v32, 2.0
    %v35 = vrcp.pop %v33
    %v36 = vmul.f32 %v31, %v35
    %v37 = vrcp.pop %v34
    %v38 = vmul.f32 %v32, %v37
    %v39 = vmul.f32 %v21, %v36
    %v40 = vmul.f32 %v22, %v38
    %vm41 = vcmp.gt.f32.partialorder %v21, 20.0
    %vm42 = vcmp.gt.f32.partialorder %v22, 20.0
    %v43 = vsel %vm41, %v21, %v39
    %v44 = vsel %vm42, %v22, %v40
    %45 = vst [vmem:[#allocation5] sm:$0xff] %v43
    %46 = vst [vmem:[#allocation5 + $0x8] sm:$0xff] %v44
    // Predicated region
    $region10: #{tpu_custom_call.1} parent=1 // pred_check
      _
    $region11: #{tpu_custom_call.1} parent=1 // pred_check_branch
      %48 = sbr.rel (0) target = $region13
    $region12: #{tpu_custom_call.1} parent=1 // pred_region
      %s50 = ssub.s32 256, 256
      %51 = vsyncadd [#allocation4], %s50
      %s53 = sshll.u32 [#allocation5], 4
      %s54 = int_to_ptr.vmem [resolvable:$true] %s53
      %56 = dma.vmem_to_hbm [thread:$0]  %s54, 256, %s1, [#allocation4]
    $region13: #{tpu_custom_call.1} parent=1 // pred_fallthru
      _
    // Predicated region
    $region14: #{tpu_custom_call.1} parent=1 // pred_check
      _
    $region15: #{tpu_custom_call.1} parent=1 // pred_check_branch
      %58 = sbr.rel (0) target = $region17
    $region16: #{tpu_custom_call.1} parent=1 // pred_region
      %59 = dma.done [#allocation4], 256
    $region17: #{tpu_custom_call.1} parent=1 // pred_fallthru
      _
    %60 = vsyncpa [#allocation3], 1
    %61 = vsyncpa [#allocation4], 1

</llo_original>
